<compile_context>
chip_gen: v7x
topology: tpu7x:2x2x1
jax: 0.10.0
libtpu: 0.0.40
codegen_flags: <defaults>
</compile_context>

<pallas_src>
import jax
import jax.numpy as jnp
import numpy as np
from jax.experimental import pallas as pl
from jax.experimental.pallas import tpu as pltpu


# ----------------------------------------------------------------------------
# Fused kernel: one batch-block (Bt elements) per grid step
# ----------------------------------------------------------------------------
def _fused_transfer_kernel(x_ref, wconv_ref, bias_ref, wfc_ref, o_ref):
    """Ref shapes (leading grid dim squeezed by the BlockSpecs):
      x_ref    : (Bt*H, 3*W*Cin)  bf16   row h holds [xp[h], xp[h+1], xp[h+2]]
      wconv_ref: (3*W*Cin, W*Cout) bf16  fused banded conv weights (kh, kw, Cin->Cout)
      bias_ref : (2, W*Cout)      f32    row 0 = tiled conv bias, row 1 = fc bias (padded)
      wfc_ref  : (nc, H, W*Cout)  f32    classifier weights in (h, w*Cout+co) layout
      o_ref    : (Bt, OUT_LANES)  f32    lane-padded logits (first nc lanes valid)
    """
    Bt, _ = o_ref.shape
    nc, H, C = wfc_ref.shape

    # ---- features: Conv2d(3x3, pad=1) as ONE MXU matmul (f32 accumulate) ----
    acc = jnp.dot(x_ref[...], wconv_ref[...],
                  preferred_element_type=jnp.float32)          # (Bt*H, C)
    biases = bias_ref[...]
    feat = jnp.maximum(acc + biases[0:1, :], 0.0)              # bias + ReLU, f32

    # ---- classifier: one vectorized weighted reduction (VPU mul + XLU reduce) ----
    feat3 = feat.reshape(Bt, H, C)                             # sublane-major split, free
    prod = feat3[:, None, :, :] * wfc_ref[...][None, :, :, :]  # (Bt, nc, H, C)
    y = jnp.sum(jnp.sum(prod, axis=-1), axis=-1)               # (Bt, nc)
    y = y + biases[1:2, 0:nc]                                  # fc bias

    # ---- lane-dense output store (full 128-lane block), logits in lanes [0, nc) ----
    o_ref[...] = jnp.zeros_like(o_ref)
    o_ref[:, 0:nc] = y.astype(o_ref.dtype)


# ----------------------------------------------------------------------------
# Batch-block sizing: fill the MXU M dimension but keep >= 2 grid steps (v7x)
# ----------------------------------------------------------------------------
def _pick_block_batch(B, H, target_rows=128):
    target = max(1, target_rows // max(H, 1))
    best = 1
    for bt in range(1, B + 1):
        if bt > target or B % bt != 0:
            continue
        if B // bt >= 2 or B == 1:
            best = bt
    return best


# ----------------------------------------------------------------------------
# Forward wrapper (single pallas_call)
# ----------------------------------------------------------------------------
def transfer_features_forward(x_nchw, w_conv_fused, biases, w_fc_r, *, block_batch=None):
    """f = relu(conv3x3_pad1(x)); y = fc(f.view(B, -1)) — one fused Pallas call."""
    B, Cin, H, W = x_nchw.shape
    nc, Hf, C = w_fc_r.shape
    K3 = w_conv_fused.shape[0]                       # 3 * W * Cin
    OUT_LANES = ((nc + 127) // 128) * 128            # lane-dense padded class dim
    WCin = W * Cin

    # Tiny per-call layout glue (small activation): NCHW -> (B, H, W*Cin),
    # height pad only (width boundary folded into the banded weights), then the
    # kh row-shift as a single 3-way concat -> (B*H, 3*W*Cin) bf16 MXU rows.
    x_rows = jnp.transpose(x_nchw, (0, 2, 3, 1)).reshape(B, H, WCin)
    xp = jnp.pad(x_rows, ((0, 0), (1, 1), (0, 0)))
    x3 = jnp.concatenate([xp[:, 0:H], xp[:, 1:H + 1], xp[:, 2:H + 2]], axis=-1)
    x3 = x3.reshape(B * H, K3).astype(jnp.bfloat16)

    Bt = block_batch if block_batch is not None else _pick_block_batch(B, H)
    steps = B // Bt

    out3 = pl.pallas_call(
        _fused_transfer_kernel,
        out_shape=jax.ShapeDtypeStruct((steps, Bt, OUT_LANES), jnp.float32),
        grid_spec=pltpu.PrefetchScalarGridSpec(
            num_scalar_prefetch=0,
            grid=(steps,),                                     # Bt batch elems per step
            in_specs=[
                pl.BlockSpec((Bt * H, K3), lambda i: (i, 0)),          # activations
                pl.BlockSpec((K3, C), lambda i: (0, 0)),               # fused conv W
                pl.BlockSpec((2, C), lambda i: (0, 0)),                # packed biases
                pl.BlockSpec((nc, Hf, C), lambda i: (0, 0, 0)),        # fc weights
            ],
            out_specs=pl.BlockSpec((None, Bt, OUT_LANES), lambda i: (i, 0, 0)),
        ),
        compiler_params=pltpu.CompilerParams(
            dimension_semantics=("parallel",)),                # megacore on v7x
    )(x3, w_conv_fused, biases, w_fc_r)

    return out3.reshape(B, OUT_LANES)[:, :nc]


# ----------------------------------------------------------------------------
# One-time weight preparation (frozen backbone -> nothing here runs per call)
# ----------------------------------------------------------------------------
def prepare_params(params, *, H, W):
    conv_w = np.asarray(params["conv_w"], np.float32)   # (Cout, Cin, 3, 3)
    conv_b = np.asarray(params["conv_b"], np.float32)   # (Cout,)
    fc_w = np.asarray(params["fc_w"], np.float32)       # (nc, Cout*H*W), NCHW-flatten cols
    fc_b = np.asarray(params["fc_b"], np.float32)       # (nc,)
    Cout, Cin = conv_w.shape[0], conv_w.shape[1]
    nc = fc_w.shape[0]
    WCin = W * Cin
    C = W * Cout

    # Fused banded conv weights over UNPADDED width: one (3*W*Cin, W*Cout) matrix
    # that folds kh (row offset), kw (band), the Cin->Cout mixing, and the width
    # zero-pad boundary (out-of-range taps stay zero) -> im2col done by the MXU.
    w_fused = np.zeros((3 * WCin, C), np.float32)
    for kh in range(3):
        for kw in range(3):
            blk = conv_w[:, :, kh, kw].T                 # (Cin, Cout)
            for w in range(W):
                wi = w + kw - 1                          # input column (pad=1)
                if 0 <= wi < W:
                    r0 = kh * WCin + wi * Cin
                    c0 = w * Cout
                    w_fused[r0:r0 + Cin, c0:c0 + Cout] = blk

    # Both biases merged into one small f32 operand: row 0 = conv bias tiled to
    # the (w*Cout+co) lane layout, row 1 = fc bias (zero padded to C lanes).
    biases = np.zeros((2, C), np.float32)
    biases[0, :] = np.tile(conv_b, W)
    biases[1, :nc] = fc_b

    # fc weights pre-permuted from NCHW-flatten columns (co*H*W + h*W + w) to the
    # kernel's natural feature layout (n, h, w*Cout + co): no runtime transpose.
    w_fc_r = (fc_w.reshape(nc, Cout, H, W)
              .transpose(0, 2, 3, 1)
              .reshape(nc, H, C))

    return {
        "w_conv_fused": jnp.asarray(w_fused, jnp.bfloat16),   # MXU operand -> bf16
        "biases": jnp.asarray(biases),                        # elementwise -> f32
        "w_fc_r": jnp.asarray(np.ascontiguousarray(w_fc_r)),  # elementwise -> f32
    }


def init_params(key, cin=4, cout=8, hw=16, num_classes=2):
    k1, k2, k3, k4 = jax.random.split(key, 4)
    return {
        "conv_w": 0.1 * jax.random.normal(k1, (cout, cin, 3, 3), jnp.float32),
        "conv_b": 0.1 * jax.random.normal(k2, (cout,), jnp.float32),
        "fc_w": 0.05 * jax.random.normal(k3, (num_classes, cout * hw * hw),
                                         jnp.float32),
        "fc_b": 0.05 * jax.random.normal(k4, (num_classes,), jnp.float32),
    }


# ----------------------------------------------------------------------------
# Pure-JAX reference (mirrors the PyTorch module) for the correctness check
# ----------------------------------------------------------------------------
def _reference_forward(x_nchw, params):
    B, Cin, H, W = x_nchw.shape
    conv_w, conv_b = params["conv_w"], params["conv_b"]
    fc_w, fc_b = params["fc_w"], params["fc_b"]
    Cout = conv_w.shape[0]
    x_nhwc = jnp.transpose(x_nchw, (0, 2, 3, 1))
    xp = jnp.pad(x_nhwc, ((0, 0), (1, 1), (1, 1), (0, 0)))
    taps = [xp[:, i:i + H, j:j + W, :] for i in range(3) for j in range(3)]
    patches = jnp.concatenate(taps, axis=-1).reshape(B * H * W, 9 * Cin)
    w_mat = jnp.transpose(conv_w, (2, 3, 1, 0)).reshape(9 * Cin, Cout)
    f = jnp.maximum(patches @ w_mat + conv_b, 0.0).reshape(B, H, W, Cout)
    f_flat = jnp.transpose(f, (0, 3, 1, 2)).reshape(B, Cout * H * W)
    return f_flat @ fc_w.T + fc_b


if __name__ == "__main__":
    key = jax.random.PRNGKey(0)
    kx, kp = jax.random.split(key)

    B, C, H, W = 2, 4, 16, 16
    NUM_CLASSES = 2
    x = jax.random.normal(kx, (B, C, H, W), jnp.float32)     # NCHW like PyTorch
    params = init_params(kp, cin=C, cout=8, hw=H, num_classes=NUM_CLASSES)
    prep = prepare_params(params, H=H, W=W)                   # one-time weight prep

    fwd = jax.jit(transfer_features_forward)
    y = fwd(x, prep["w_conv_fused"], prep["biases"], prep["w_fc_r"])
    jax.block_until_ready(y)

    assert y.shape == (B, NUM_CLASSES) and y.dtype == jnp.float32
    y_ref = _reference_forward(x, params)
    # bf16 MXU operands -> ~1e-3 relative error; tolerance kept comfortably above.
    assert bool(jnp.allclose(y, y_ref, atol=2e-2, rtol=2e-2)), (y, y_ref)
    print("KERNEL_OK")
</pallas_src>

<mosaic_0001>
module attributes {stable_mosaic.version = 11 : i64} {
  func.func @_fused_transfer_kernel(%arg0: i32, %arg1: memref<16x192xbf16, #tpu.memory_space<vmem>>, %arg2: memref<192x128xbf16, #tpu.memory_space<vmem>>, %arg3: memref<2x128xf32, #tpu.memory_space<vmem>>, %arg4: memref<2x16x128xf32, #tpu.memory_space<vmem>>, %arg5: memref<1x1x128xf32, #tpu.memory_space<vmem>>) attributes {dimension_semantics = [#tpu.dimension_semantics<parallel>], iteration_bounds = array<i64: 2>, scalar_prefetch = 0 : i64, scratch_operands = 0 : i64, tpu.core_type = #tpu.core_type<tc>, window_params = [{transform_indices = @transform_0, window_bounds = array<i64: 16, 192>}, {pipeline_mode = #tpu.pipeline_mode<synchronous>, transform_indices = @transform_1, window_bounds = array<i64: 192, 128>}, {pipeline_mode = #tpu.pipeline_mode<synchronous>, transform_indices = @transform_2, window_bounds = array<i64: 2, 128>}, {pipeline_mode = #tpu.pipeline_mode<synchronous>, transform_indices = @transform_3, window_bounds = array<i64: 2, 16, 128>}, {transform_indices = @transform_4, window_bounds = array<i64: 1, 1, 128>}]} {
    %c0 = arith.constant 0 : index
    %c0_0 = arith.constant 0 : index
    %0 = vector.load %arg1[%c0, %c0_0] : memref<16x192xbf16, #tpu.memory_space<vmem>>, vector<16x192xbf16>
    %c0_1 = arith.constant 0 : index
    %c0_2 = arith.constant 0 : index
    %1 = vector.load %arg2[%c0_1, %c0_2] : memref<192x128xbf16, #tpu.memory_space<vmem>>, vector<192x128xbf16>
    %cst = arith.constant dense<0.000000e+00> : vector<16x128xf32>
    %2 = tpu.matmul %0, %1, %cst {dimension_numbers = #tpu.dot_dimension_numbers<[1], [0], [0], [1], [0, 0, 1, 1], [], []>} : vector<16x192xbf16>, vector<192x128xbf16>, vector<16x128xf32> -> vector<16x128xf32>
    %c0_3 = arith.constant 0 : index
    %c0_4 = arith.constant 0 : index
    %3 = vector.load %arg3[%c0_3, %c0_4] : memref<2x128xf32, #tpu.memory_space<vmem>>, vector<2x128xf32>
    %4 = vector.extract_strided_slice %3 {offsets = [0, 0], sizes = [1, 128], strides = [1, 1]} : vector<2x128xf32> to vector<1x128xf32>
    %5 = vector.broadcast %4 : vector<1x128xf32> to vector<16x128xf32>
    %6 = arith.addf %2, %5 : vector<16x128xf32>
    %cst_5 = arith.constant 0.000000e+00 : f32
    %7 = vector.broadcast %cst_5 : f32 to vector<16x128xf32>
    %8 = arith.maximumf %6, %7 : vector<16x128xf32>
    %9 = vector.shape_cast %8 : vector<16x128xf32> to vector<1x16x128xf32>
    %10 = vector.shape_cast %9 : vector<1x16x128xf32> to vector<1x1x16x128xf32>
    %c0_6 = arith.constant 0 : index
    %c0_7 = arith.constant 0 : index
    %c0_8 = arith.constant 0 : index
    %11 = vector.load %arg4[%c0_6, %c0_7, %c0_8] : memref<2x16x128xf32, #tpu.memory_space<vmem>>, vector<2x16x128xf32>
    %12 = vector.shape_cast %11 : vector<2x16x128xf32> to vector<1x2x16x128xf32>
    %13 = vector.broadcast %10 : vector<1x1x16x128xf32> to vector<1x2x16x128xf32>
    %14 = arith.mulf %13, %12 : vector<1x2x16x128xf32>
    %cst_9 = arith.constant dense<0.000000e+00> : vector<1x2x16xf32>
    %15 = vector.multi_reduction <add>, %14, %cst_9 [3] : vector<1x2x16x128xf32> to vector<1x2x16xf32>
    %cst_10 = arith.constant dense<0.000000e+00> : vector<1x2xf32>
    %16 = vector.multi_reduction <add>, %15, %cst_10 [2] : vector<1x2x16xf32> to vector<1x2xf32>
    %17 = vector.extract_strided_slice %3 {offsets = [1, 0], sizes = [1, 2], strides = [1, 1]} : vector<2x128xf32> to vector<1x2xf32>
    %18 = arith.addf %16, %17 : vector<1x2xf32>
    %cst_11 = arith.constant 0.000000e+00 : f32
    %19 = vector.broadcast %cst_11 : f32 to vector<1x128xf32>
    %c0_12 = arith.constant 0 : index
    %c0_13 = arith.constant 0 : index
    %c0_14 = arith.constant 0 : index
    %20 = vector.load %arg5[%c0_12, %c0_13, %c0_14] : memref<1x1x128xf32, #tpu.memory_space<vmem>>, vector<1x1x128xf32>
    %21 = vector.shape_cast %20 : vector<1x1x128xf32> to vector<1x128xf32>
    %22 = vector.shape_cast %19 : vector<1x128xf32> to vector<1x1x128xf32>
    tpu.vector_store %arg5[%c0_12, %c0_13, %c0_14], %22 {strides = array<i32>} : memref<1x1x128xf32, #tpu.memory_space<vmem>>, vector<1x1x128xf32>,
    %c0_15 = arith.constant 0 : index
    %c0_16 = arith.constant 0 : index
    %c0_17 = arith.constant 0 : index
    %23 = vector.load %arg5[%c0_15, %c0_16, %c0_17] : memref<1x1x128xf32, #tpu.memory_space<vmem>>, vector<1x1x2xf32>
    %24 = vector.shape_cast %23 : vector<1x1x2xf32> to vector<1x2xf32>
    %25 = vector.shape_cast %18 : vector<1x2xf32> to vector<1x1x2xf32>
    tpu.vector_store %arg5[%c0_15, %c0_16, %c0_17], %25 {strides = array<i32>} : memref<1x1x128xf32, #tpu.memory_space<vmem>>, vector<1x1x2xf32>,
    return
  }
  func.func @transform_0(%arg0: i32) -> (i32, i32) {
    %c0_i32 = arith.constant 0 : i32
    %c0_i32_0 = arith.constant 0 : i32
    return %arg0, %c0_i32 : i32, i32
  }
  func.func @transform_1(%arg0: i32) -> (i32, i32) {
    %c0_i32 = arith.constant 0 : i32
    %c0_i32_0 = arith.constant 0 : i32
    %c0_i32_1 = arith.constant 0 : i32
    return %c0_i32, %c0_i32_0 : i32, i32
  }
  func.func @transform_2(%arg0: i32) -> (i32, i32) {
    %c0_i32 = arith.constant 0 : i32
    %c0_i32_0 = arith.constant 0 : i32
    %c0_i32_1 = arith.constant 0 : i32
    return %c0_i32, %c0_i32_0 : i32, i32
  }
  func.func @transform_3(%arg0: i32) -> (i32, i32, i32) {
    %c0_i32 = arith.constant 0 : i32
    %c0_i32_0 = arith.constant 0 : i32
    %c0_i32_1 = arith.constant 0 : i32
    %c0_i32_2 = arith.constant 0 : i32
    return %c0_i32, %c0_i32_0, %c0_i32_1 : i32, i32, i32
  }
  func.func @transform_4(%arg0: i32) -> (i32, i32, i32) {
    %c0_i32 = arith.constant 0 : i32
    %c0_i32_0 = arith.constant 0 : i32
    %c0_i32_1 = arith.constant 0 : i32
    return %arg0, %c0_i32, %c0_i32_0 : i32, i32, i32
  }
}

</mosaic_0001>

<llo_original>
// kernel: transfer_features_forward.1
$region0: #{transfer_features_forward.1}
  #allocation0 [shape = 'u32[]', space=smem, size = 0x4, offset = 0x4, fixed_abs, tag = 'smem constant byte address 0x4 - core index']
  #allocation1 [shape = 'u32[144,128]{1,0:T(1,128)}', space=vmem, size = 0x12000, scoped, tag = 'internal scratch']
  %s0 = inlined_call_operand.vmem [shape: bf16[32,192], index: 0, kind: input, shape index: {}]
  %s1 = inlined_call_operand.vmem [shape: bf16[192,128], index: 1, kind: input, shape index: {}]
  %s2 = inlined_call_operand.vmem [shape: f32[2,128], index: 2, kind: input, shape index: {}]
  %s3 = inlined_call_operand.vmem [shape: f32[2,16,128], index: 3, kind: input, shape index: {}]
  %s4 = inlined_call_operand.hbm [shape: f32[2,1,128], index: 4, kind: output, shape index: {}]
  %s5 = sld [smem:[#allocation0]]
  $region49: #{transfer_features_forward.1} parent=0
    _
  %s7 = ssub.s32 1, %s5
  %s8 = scalar_select 0, %s7, %s5
  $region1: #{transfer_features_forward.1} parent=0
    #allocation2 [shape = 'u8[1024]{0}', space=vmem, size = 0x400, scoped, tag = 'output window, operand 0']
    #allocation3 [shape = 's32[2]{0}', space=sflag, size = 0x8, scoped, tag = 'scoped memory for transfer_features_forward.1']
    %9 = vsyncpa [#allocation3], 0
    %s10 = scalar_lea.sflag [#allocation3], 1
    %11 = vsyncpa %s10, 0
    loop: start=0, step=1, limit=4
    $region2: #{transfer_features_forward.1} parent=1 // loop_pre_header
      _
    $region3: #{transfer_features_forward.1} parent=1 // loop_header
      %s13 = sphi 0, %s17
      %p14 = scmp.ge.s32.totalorder %s13, 4
      %s23 = sphi 0, %s25
      %s26 = sphi 0, %s23
      %s27 = sphi 0, %s26
      %s43 = sphi 0, %s27
      %s47 = sphi 0, %s47
      %s49 = sphi 0, %s47
      %s50 = sphi 0, %s49
      %s64 = sphi 0, %s50
      %s68 = sphi 0, %s68
      %s70 = sphi 0, %s68
      %s71 = sphi 0, %s70
      %s85 = sphi 0, %s71
      %s89 = sphi 0, %s89
      %s91 = sphi 0, %s89
      %s92 = sphi 0, %s91
      %s106 = sphi 0, %s92
      %s112 = sphi 0, %s114
      %s115 = sphi 0, %s112
      %s116 = sphi 0, %s115
      %s132 = sphi 0, %s116
    $region4: #{transfer_features_forward.1} parent=1 // loop_header_branch
      %16 = sbr.rel (%p14) target = $region8
    $region5: #{transfer_features_forward.1} parent=1 // loop_body
      %s18 = ssub.s32 %s13, 1
      %s19 = ssub.s32 %s13, 2
      %s20 = sadd.s32 %s13, 1
      %s21 = ssub.s32 %s13, %s20
      %p22 = scmp.eq.s32.totalorder %s21, 0
      %s24 = sadd.s32 %s23, 1
      %s25 = scalar_select %p22, %s23, %s24
      %p28 = pneg %p22
      %p29 = scmp.eq.s32.totalorder %s13, 1
      %p30 = por %p28, %p29
      %p31 = scmp.ne.s32.totalorder %s23, %s26
      %p32 = scmp.eq.s32.totalorder %s13, 0
      %p33 = por %p31, %p32
      %p34 = scmp.ne.s32.totalorder %s23, %s26
      %p35 = scmp.eq.s32.totalorder %s18, 1
      %p36 = por %p34, %p35
      %p37 = scmp.ne.s32.totalorder %s26, %s27
      %p38 = scmp.eq.s32.totalorder %s18, 0
      %p39 = por %p37, %p38
      %p40 = scmp.ne.s32.totalorder %s26, %s27
      %p41 = scmp.eq.s32.totalorder %s19, 1
      %p42 = por %p40, %p41
      %p44 = scmp.ne.s32.totalorder %s27, %s43
      %p45 = scmp.eq.s32.totalorder %s19, 0
      %p46 = por %p44, %p45
      %s48 = sadd.s32 %s47, 1
      %p51 = scmp.eq.s32.totalorder %s13, 1
      %p52 = scmp.ne.s32.totalorder %s47, %s49
      %p53 = scmp.eq.s32.totalorder %s13, 0
      %p54 = por %p52, %p53
      %p55 = scmp.ne.s32.totalorder %s47, %s49
      %p56 = scmp.eq.s32.totalorder %s18, 1
      %p57 = por %p55, %p56
      %p58 = scmp.ne.s32.totalorder %s49, %s50
      %p59 = scmp.eq.s32.totalorder %s18, 0
      %p60 = por %p58, %p59
      %p61 = scmp.ne.s32.totalorder %s49, %s50
      %p62 = scmp.eq.s32.totalorder %s19, 1
      %p63 = por %p61, %p62
      %p65 = scmp.ne.s32.totalorder %s50, %s64
      %p66 = scmp.eq.s32.totalorder %s19, 0
      %p67 = por %p65, %p66
      %s69 = sadd.s32 %s68, 1
      %p72 = scmp.eq.s32.totalorder %s13, 1
      %p73 = scmp.ne.s32.totalorder %s68, %s70
      %p74 = scmp.eq.s32.totalorder %s13, 0
      %p75 = por %p73, %p74
      %p76 = scmp.ne.s32.totalorder %s68, %s70
      %p77 = scmp.eq.s32.totalorder %s18, 1
      %p78 = por %p76, %p77
      %p79 = scmp.ne.s32.totalorder %s70, %s71
      %p80 = scmp.eq.s32.totalorder %s18, 0
      %p81 = por %p79, %p80
      %p82 = scmp.ne.s32.totalorder %s70, %s71
      %p83 = scmp.eq.s32.totalorder %s19, 1
      %p84 = por %p82, %p83
      %p86 = scmp.ne.s32.totalorder %s71, %s85
      %p87 = scmp.eq.s32.totalorder %s19, 0
      %p88 = por %p86, %p87
      %s90 = sadd.s32 %s89, 1
      %p93 = scmp.eq.s32.totalorder %s13, 1
      %p94 = scmp.ne.s32.totalorder %s89, %s91
      %p95 = scmp.eq.s32.totalorder %s13, 0
      %p96 = por %p94, %p95
      %p97 = scmp.ne.s32.totalorder %s89, %s91
      %p98 = scmp.eq.s32.totalorder %s18, 1
      %p99 = por %p97, %p98
      %p100 = scmp.ne.s32.totalorder %s91, %s92
      %p101 = scmp.eq.s32.totalorder %s18, 0
      %p102 = por %p100, %p101
      %p103 = scmp.ne.s32.totalorder %s91, %s92
      %p104 = scmp.eq.s32.totalorder %s19, 1
      %p105 = por %p103, %p104
      %p107 = scmp.ne.s32.totalorder %s92, %s106
      %p108 = scmp.eq.s32.totalorder %s19, 0
      %p109 = por %p107, %p108
      %s110 = ssub.s32 %s13, %s20
      %p111 = scmp.eq.s32.totalorder %s110, 0
      %s113 = sadd.s32 %s112, 1
      %s114 = scalar_select %p111, %s112, %s113
      %p117 = pneg %p111
      %p118 = scmp.eq.s32.totalorder %s13, 1
      %p119 = por %p117, %p118
      %p120 = scmp.ne.s32.totalorder %s112, %s115
      %p121 = scmp.eq.s32.totalorder %s13, 0
      %p122 = por %p120, %p121
      %p123 = scmp.ne.s32.totalorder %s112, %s115
      %p124 = scmp.eq.s32.totalorder %s18, 1
      %p125 = por %p123, %p124
      %p126 = scmp.ne.s32.totalorder %s115, %s116
      %p127 = scmp.eq.s32.totalorder %s18, 0
      %p128 = por %p126, %p127
      %p129 = scmp.ne.s32.totalorder %s115, %s116
      %p130 = scmp.eq.s32.totalorder %s19, 1
      %p131 = por %p129, %p130
      %p133 = scmp.ne.s32.totalorder %s116, %s132
      %p134 = scmp.eq.s32.totalorder %s19, 0
      %p135 = por %p133, %p134
      %p136 = scmp.le.s32.totalorder 1, %s13
      %p137 = scmp.lt.s32.totalorder %s13, 3
      %p138 = pnand %p136, %p137
      %p139 = pneg %p138
      // Predicated region
      $region9: #{transfer_features_forward.1} parent=5 // pred_check
        _
      $region10: #{transfer_features_forward.1} parent=5 // pred_check_branch
        %141 = sbr.rel (%p138) target = $region12
      $region11: #{transfer_features_forward.1} parent=5 // pred_region
        %s142 = ssub.s32 %s13, 1
        // Predicated region
        $region13: #{transfer_features_forward.1} parent=11 // pred_check
          %p143 = pneg %p60
        $region14: #{transfer_features_forward.1} parent=11 // pred_check_branch
          %145 = sbr.rel (%p143) target = $region16
        $region15: #{transfer_features_forward.1} parent=11 // pred_region
          _
        $region16: #{transfer_features_forward.1} parent=11 // pred_fallthru
          _
        // Predicated region
        $region17: #{transfer_features_forward.1} parent=11 // pred_check
          %p146 = pneg %p81
        $region18: #{transfer_features_forward.1} parent=11 // pred_check_branch
          %148 = sbr.rel (%p146) target = $region20
        $region19: #{transfer_features_forward.1} parent=11 // pred_region
          _
        $region20: #{transfer_features_forward.1} parent=11 // pred_fallthru
          _
        // Predicated region
        $region21: #{transfer_features_forward.1} parent=11 // pred_check
          %p149 = pneg %p102
        $region22: #{transfer_features_forward.1} parent=11 // pred_check_branch
          %151 = sbr.rel (%p149) target = $region24
        $region23: #{transfer_features_forward.1} parent=11 // pred_region
          _
        $region24: #{transfer_features_forward.1} parent=11 // pred_fallthru
          _
      $region12: #{transfer_features_forward.1} parent=5 // pred_fallthru
        _
      %p152 = scmp.lt.s32.totalorder %s13, 2
      // Predicated region
      $region25: #{transfer_features_forward.1} parent=5 // pred_check
        %p153 = pneg %p152
      $region26: #{transfer_features_forward.1} parent=5 // pred_check_branch
        %155 = sbr.rel (%p153) target = $region28
      $region27: #{transfer_features_forward.1} parent=5 // pred_region
        // Predicated region
        $region29: #{transfer_features_forward.1} parent=27 // pred_check
          %p156 = pneg %p33
        $region30: #{transfer_features_forward.1} parent=27 // pred_check_branch
          %158 = sbr.rel (%p156) target = $region32
        $region31: #{transfer_features_forward.1} parent=27 // pred_region
          %s159 = smul.u32 2, %s13
          %p160 = scmp.lt.s32.totalorder %s159, 3
          %s161 = scalar_select %p160, %s159, 3
          %s162 = smul.addr %s161, 2
          %s163 = smul.addr %s162, 4
          %s164 = scalar_lea.vmem %s0, %s163
          %s165 = smul.u32 2, %s13
        $region32: #{transfer_features_forward.1} parent=27 // pred_fallthru
          _
      $region28: #{transfer_features_forward.1} parent=5 // pred_fallthru
        _
      %p166 = scmp.le.s32.totalorder 1, %s13
      %p167 = scmp.lt.s32.totalorder %s13, 3
      %p168 = pnand %p166, %p167
      %p169 = pneg %p168
      // Predicated region
      $region33: #{transfer_features_forward.1} parent=5 // pred_check
        _
      $region34: #{transfer_features_forward.1} parent=5 // pred_check_branch
        %171 = sbr.rel (%p168) target = $region36
      $region35: #{transfer_features_forward.1} parent=5 // pred_region
        %s172 = ssub.s32 %s13, 1
        %s173 = smul.u32 2, %s18
        %p174 = scmp.lt.s32.totalorder %s173, 3
        %s175 = scalar_select %p174, %s173, 3
        %s176 = smul.addr %s175, 2
        %s177 = smul.addr %s176, 4
        %s178 = scalar_lea.vmem %s0, %s177
        %p179 = pneg %p39
        %p180 = pneg %p36
        %p181 = pneg %p60
        %p182 = pneg %p57
        %p183 = pneg %p81
        %p184 = pneg %p78
        %p185 = pneg %p102
        %p186 = pneg %p99
        %p187 = pneg %p128
        %p188 = pneg %p125
        %s189 = sand.u32 %s115, 1
        %s190 = scalar_lea.sflag [#allocation3], %s189
        %s191 = sand.u32 %s115, 1
        %s192 = scalar_lea.vmem [#allocation2], %s191
        %s193 = smul.u32 2, %s18
        %p194 = scmp.lt.s32.totalorder %s193, 3
        %s195 = scalar_select %p194, %s193, 3
        %s196 = smul.addr %s195, 2
        %s197 = smul.addr %s196, 4
        %s198 = scalar_lea.vmem %s0, %s197
        %s199 = smul.u32 2, %s18
        %v201 = vld [vmem:[%s198] sm:$0xff]
        %v202 = vld [vmem:[%s198 + $0x8] sm:$0xff]
        %v203 = vld [vmem:[%s1] sm:$0xf]
        %v204 = vld [vmem:[%s1 + $0x4] sm:$0xf]
        %v205 = vld [vmem:[%s1 + $0x8] sm:$0xf]
        %v206 = vld [vmem:[%s1 + $0xc] sm:$0xf]
        %v207 = vld [vmem:[%s1 + $0x10] sm:$0xf]
        %v208 = vld [vmem:[%s1 + $0x14] sm:$0xf]
        %v209 = vld [vmem:[%s1 + $0x18] sm:$0xf]
        %v210 = vld [vmem:[%s1 + $0x1c] sm:$0xf]
        %v211 = vld [vmem:[%s1 + $0x20] sm:$0xf]
        %v212 = vld [vmem:[%s1 + $0x24] sm:$0xf]
        %v213 = vld [vmem:[%s1 + $0x28] sm:$0xf]
        %v214 = vld [vmem:[%s1 + $0x2c] sm:$0xf]
        %v215 = vld [vmem:[%s1 + $0x30] sm:$0xf]
        %v216 = vld [vmem:[%s1 + $0x34] sm:$0xf]
        %v217 = vld [vmem:[%s1 + $0x38] sm:$0xf]
        %v218 = vld [vmem:[%s1 + $0x3c] sm:$0xf]
        %v219 = vld [vmem:[%s1 + $0x40] sm:$0xf]
        %v220 = vld [vmem:[%s1 + $0x44] sm:$0xf]
        %v221 = vld [vmem:[%s1 + $0x48] sm:$0xf]
        %v222 = vld [vmem:[%s1 + $0x4c] sm:$0xf]
        %v223 = vld [vmem:[%s1 + $0x50] sm:$0xf]
        %v224 = vld [vmem:[%s1 + $0x54] sm:$0xf]
        %v225 = vld [vmem:[%s1 + $0x58] sm:$0xf]
        %v226 = vld [vmem:[%s1 + $0x5c] sm:$0xf]
        %v227 = vld [vmem:[%s2] sm:$0x3]
        %v228 = vlaneseq
        %v229 = vshrl.u32 %v228, 7
        %v230 = vsub.s32 0, %v229
        %v231 = vrot.slane %v227, %v230
        %v234 = vunpack.c.l.b16 %v201
        %v235 = vunpack.c.h.b16 %v201
        %v236 = vunpack.c.l.b16 %v202
        %v237 = vunpack.c.h.b16 %v202
        %v238 = vpack.c.b16 %v236, %v234
        %v239 = vpack.c.b16 %v237, %v235
        %v265 = vunpack.c.l.b16 %v203
        %v266 = vunpack.c.l.b16 %v204
        %v267 = vunpack.c.l.b16 %v205
        %v268 = vunpack.c.l.b16 %v206
        %v269 = vunpack.c.l.b16 %v207
        %v270 = vunpack.c.l.b16 %v208
        %v271 = vunpack.c.l.b16 %v209
        %v272 = vunpack.c.l.b16 %v210
        %v273 = vunpack.c.l.b16 %v211
        %v274 = vunpack.c.l.b16 %v212
        %v275 = vunpack.c.l.b16 %v213
        %v276 = vunpack.c.l.b16 %v214
        %v277 = vunpack.c.l.b16 %v215
        %v278 = vunpack.c.l.b16 %v216
        %v279 = vunpack.c.l.b16 %v217
        %v280 = vunpack.c.l.b16 %v218
        %v281 = vunpack.c.l.b16 %v219
        %v282 = vunpack.c.l.b16 %v220
        %v283 = vunpack.c.l.b16 %v221
        %v284 = vunpack.c.l.b16 %v222
        %v285 = vunpack.c.l.b16 %v223
        %v286 = vunpack.c.l.b16 %v224
        %v287 = vunpack.c.l.b16 %v225
        %v288 = vunpack.c.l.b16 %v226
        %v289 = vpack.c.b16 %v266, %v265
        %v290 = vpack.c.b16 %v268, %v267
        %v291 = vpack.c.b16 %v270, %v269
        %v292 = vpack.c.b16 %v272, %v271
        %v293 = vpack.c.b16 %v274, %v273
        %v294 = vpack.c.b16 %v276, %v275
        %v295 = vpack.c.b16 %v278, %v277
        %v296 = vpack.c.b16 %v280, %v279
        %v297 = vpack.c.b16 %v282, %v281
        %v298 = vpack.c.b16 %v284, %v283
        %v299 = vpack.c.b16 %v286, %v285
        %v300 = vpack.c.b16 %v288, %v287
        %vm313 = vcmask 523264
        %v315 = vsel %vm313, %v239, 0
        %317 = vmatprep.subr.bf16.mxu0 0
        %318 = vmatpush1.bf16.msra.mxu0 %v289
        %319 = vmatprep.subr.bf16.mxu0 0
        %320 = vmatpush1.bf16.msra.mxu0 %v290
        %321 = vmatprep.subr.bf16.mxu0 0
        %322 = vmatpush1.bf16.msra.mxu0 %v291
        %323 = vmatprep.subr.bf16.mxu0 0
        %324 = vmatpush1.bf16.msra.mxu0 %v292
        %325 = vmatprep.subr.bf16.mxu0 0
        %326 = vmatpush1.bf16.msra.mxu0 %v293
        %327 = vmatprep.subr.bf16.mxu0 0
        %328 = vmatpush1.bf16.msra.mxu0 %v294
        %329 = vmatprep.subr.bf16.mxu0 0
        %330 = vmatpush1.bf16.msra.mxu0 %v295
        %331 = vmatprep.subr.bf16.mxu0 0
        %332 = vmatpush1.bf16.msra.mxu0 %v296
        %333 = vmatprep.subr.bf16.mxu0 0
        %334 = vmatpush1.bf16.msra.mxu0 %v297
        %335 = vmatprep.subr.bf16.mxu0 0
        %336 = vmatpush1.bf16.msra.mxu0 %v298
        %337 = vmatprep.subr.bf16.mxu0 0
        %338 = vmatpush1.bf16.msra.mxu0 %v299
        %339 = vmatprep.subr.bf16.mxu0 0
        %340 = vmatpush1.bf16.msra.mxu0 %v300
        %341 = vmatprep.subr.bf16.mxu0 0
        %342 = vmatpush1.bf16.msra.mxu0 0
        %343 = vmatprep.subr.bf16.mxu0 0
        %344 = vmatpush1.bf16.msra.mxu0 0
        %345 = vmatprep.subr.bf16.mxu0 0
        %346 = vmatpush1.bf16.msra.mxu0 0
        %347 = vmatprep.subr.bf16.mxu0 0
        %348 = vmatpush1.bf16.msra.mxu0 0
        %349 = vmatprep.mubr.bf16.mxu0 %v315
        %350 = vmatmul.mubr.bf16.gmra.mrb[0].mxu0 %v238
        %v351 = vpop.f32.mrb[0].mxu0
        %v352 = vadd.f32 %v231, %v351
        %v353 = vpop.f32.mrb[0].mxu0
        %v354 = vpop.f32.mrb[0].mxu0
        %v355 = vadd.f32 %v231, %v354
        %v356 = vpop.f32.mrb[0].mxu0
        %357 = vdwg.mxu0
        %v358 = vmax.f32 %v352, 0.0
        %v359 = vmax.f32 %v355, 0.0
        %v360 = vld [vmem:[%s3] sm:$0xff]
        %v361 = vld [vmem:[%s3 + $0x8] sm:$0xff]
        %v362 = vld [vmem:[%s3 + $0x10] sm:$0xff]
        %v363 = vld [vmem:[%s3 + $0x18] sm:$0xff]
        %v364 = vmul.f32 %v358, %v360
        %v365 = vmul.f32 %v359, %v361
        %v366 = vmul.f32 %v358, %v362
        %v367 = vmul.f32 %v359, %v363
        %368 = vadd.xlane.f32.xlu0 %v364
        %v369 = vpop.xlane.xlu0 %368
        %370 = vadd.xlane.f32.xlu0 %v365
        %v371 = vpop.xlane.xlu0 %370
        %372 = vadd.xlane.f32.xlu0 %v366
        %v373 = vpop.xlane.xlu0 %372
        %374 = vadd.xlane.f32.xlu0 %v367
        %v375 = vpop.xlane.xlu0 %374
        %v380 = vlaneseq
        %v381 = vand.u32 %v380, 127
        %v382 = vlaneseq
        %v383 = vshrl.u32 %v382, 7
        %v384 = vsub.s32 %v381, %v383
        %v385 = vrot.slane %v369, %v384
        %v386 = vadd.s32 %v381, 4294967288
        %v387 = vlaneseq
        %v388 = vshrl.u32 %v387, 7
        %v389 = vsub.s32 %v386, %v388
        %v390 = vrot.slane %v371, %v389
        %vm391 = vcmask 130112
        %v392 = vsel %vm391, %v390, %v385
        %v393 = vlaneseq
        %v394 = vshrl.u32 %v393, 7
        %v395 = vsub.s32 %v381, %v394
        %v396 = vrot.slane %v373, %v395
        %v397 = vlaneseq
        %v398 = vshrl.u32 %v397, 7
        %v399 = vsub.s32 %v386, %v398
        %v400 = vrot.slane %v375, %v399
        %v401 = vsel %vm391, %v400, %v396
        %vm402 = vcmask 1041409
        %v403 = vsel %vm402, %v401, %v392
        %vm405 = vcmask 123904
        %v406 = vsel %vm405, %v403, 0.0
        %407 = vadd.xlane.f32.xlu0 %v406
        %v408 = vpop.xlane.xlu0 %407
        %v410 = vlaneseq
        %v411 = vshrl.u32 %v410, 7
        %v412 = vsub.s32 1, %v411
        %v413 = vrot.slane %v227, %v412
        %415 = vbcast.lane.b32.xlu0 %v413, 256
        %v416 = vpop.permute.xlu0 %415
        %v418 = vadd.f32 %v408, %v416
        %419 = vst [vmem:[%s192] sm:$0x1] 0.0
        %421 = vset.pattern.permute.xlu0 0
        %422 = vperm.xlu0 %421, %v418
        %v423 = vpop.permute.xlu0 %422
        %v424 = vlaneseq
        %v425 = vshrl.u32 %v424, 7
        %v426 = vsub.s32 %v381, %v425
        %v427 = vrot.slane %v423, %v426
        %vm429 = vcmask 8192
        %430 = vst.msk [vmem:[%s192] sm:$0x1] %vm429, %v427
        %s431 = sand.u32 %s115, 1
        %s432 = scalar_lea.sflag [#allocation3], %s431
        %s433 = sand.u32 %s115, 1
        %s434 = scalar_lea.vmem [#allocation2], %s433
        // Predicated region
        $region37: #{transfer_features_forward.1} parent=35 // pred_check
          %p435 = pneg %p125
        $region38: #{transfer_features_forward.1} parent=35 // pred_check_branch
          %437 = sbr.rel (%p435) target = $region40
        $region39: #{transfer_features_forward.1} parent=35 // pred_region
          %s439 = ssub.s32 16, 16
          %440 = vsyncadd %s432, %s439
          %s441 = smul.addr %s18, 16
          %s442 = scalar_lea.hbm %s4, %s441
          %s444 = sshll.u32 %s434, 4
          %s445 = int_to_ptr.vmem [resolvable:$true] %s444
          %447 = dma.vmem_to_hbm [thread:$0]  %s445, 16, %s442, %s432
        $region40: #{transfer_features_forward.1} parent=35 // pred_fallthru
          _
      $region36: #{transfer_features_forward.1} parent=5 // pred_fallthru
        _
      %p448 = scmp.le.s32.totalorder 2, %s13
      // Predicated region
      $region41: #{transfer_features_forward.1} parent=5 // pred_check
        %p449 = pneg %p448
      $region42: #{transfer_features_forward.1} parent=5 // pred_check_branch
        %451 = sbr.rel (%p449) target = $region44
      $region43: #{transfer_features_forward.1} parent=5 // pred_region
        %s452 = ssub.s32 %s13, 2
        // Predicated region
        $region45: #{transfer_features_forward.1} parent=43 // pred_check
          %p453 = pneg %p131
        $region46: #{transfer_features_forward.1} parent=43 // pred_check_branch
          %455 = sbr.rel (%p453) target = $region48
        $region47: #{transfer_features_forward.1} parent=43 // pred_region
          %s456 = sand.u32 %s116, 1
          %s457 = scalar_lea.sflag [#allocation3], %s456
          %s458 = sand.u32 %s116, 1
          %s459 = scalar_lea.vmem [#allocation2], %s458
          %460 = dma.done %s457, 16
        $region48: #{transfer_features_forward.1} parent=43 // pred_fallthru
          _
      $region44: #{transfer_features_forward.1} parent=5 // pred_fallthru
        _
    $region6: #{transfer_features_forward.1} parent=1 // loop_footer
      %s17 = sadd.s32 1, %s13
    $region7: #{transfer_features_forward.1} parent=1 // loop_footer_branch
      %12 = sbr.rel target = $region3
    $region8: #{transfer_features_forward.1} parent=1 // loop_exit
      _
    %461 = vsyncpa [#allocation3], 1
    %s462 = scalar_lea.sflag [#allocation3], 1
    %463 = vsyncpa %s462, 1

</llo_original>
